<compile_context>
chip_gen: v7x
topology: tpu7x:2x2x1
jax: 0.10.0
libtpu: 0.0.40
codegen_flags: <defaults>
</compile_context>

<pallas_src>
import jax
import jax.numpy as jnp
from jax.experimental import pallas as pl
from jax.experimental.pallas import tpu as pltpu

# use full-f32 matmuls everywhere so the pure-JAX reference check is tight
jax.config.update("jax_default_matmul_precision", "highest")

# --- multi-group RBF kernel hyperparameters (deterministic, synthetic) ---
KERNEL_VARIANCE = 1.0
KERNEL_LENGTHSCALE = 1.0
KERNEL_CROSS_GROUP = 0.5      # multiplicative factor for cross-group pairs
JITTER = 1e-4

# >= default scoped VMEM on every generation, <= physical on v7x (64 MiB)
_VMEM_LIMIT = 32 * 1024 * 1024
_LANE = 128


def _choose_tile(n, max_tile=512):
    """Largest multiple-of-128 tile that evenly divides n, else the full axis."""
    if n <= max_tile:
        return n
    for t in range(max_tile - max_tile % _LANE, _LANE - 1, -_LANE):
        if n % t == 0:
            return t
    return n


def _pad_axis(a, n_pad, axis):
    """Zero-pad `axis` of `a` up to length n_pad (no-op if already there)."""
    n = a.shape[axis]
    if n == n_pad:
        return a
    widths = [(0, 0)] * a.ndim
    widths[axis] = (0, n_pad - n)
    return jnp.pad(a, widths)


# ---------------------------------------------------------------------------
# Pallas kernel 1: multi-group RBF kernel matrix  K[i, j] = k(z_i, x_j)
#   tiled over the data (lane) axis; sqdist on the VPU (dim is tiny).
# ---------------------------------------------------------------------------
def _mggp_rbf_kernel(z_ref, xt_ref, gz_ref, gxt_ref, out_ref):
    # z: (Mz, dim), xt: (dim, TN), gz: (Mz, 1) i32, gxt: (1, TN) i32
    z = z_ref[...]
    xt = xt_ref[...]
    dim = z.shape[1]
    # dim=2: direct (a-b)^2 on the VPU; avoids a K=2 MXU pass and the
    # cancellation in the ||a||^2 + ||b||^2 - 2ab identity.
    d0 = z[:, 0:1] - xt[0:1, :]
    sq = d0 * d0
    for d in range(1, dim):
        dd = z[:, d:d + 1] - xt[d:d + 1, :]
        sq = sq + dd * dd
    same = gz_ref[...] == gxt_ref[...]                        # (Mz, TN)
    scale = jnp.where(same, 1.0, KERNEL_CROSS_GROUP)
    out_ref[...] = (KERNEL_VARIANCE * scale *
                    jnp.exp(sq * (-0.5 / (KERNEL_LENGTHSCALE ** 2))))


def mggp_kernel_matrix(x1, x2, g1, g2):
    """Multi-group RBF kernel matrix, rows = x1 points, cols = x2 points."""
    n1, dim = x1.shape
    n2 = x2.shape[0]
    tn = _choose_tile(n2)
    x2t = x2.T                                  # (dim, n2): points on lanes
    g1c = g1.astype(jnp.int32).reshape(n1, 1)
    g2r = g2.astype(jnp.int32).reshape(1, n2)
    return pl.pallas_call(
        _mggp_rbf_kernel,
        out_shape=jax.ShapeDtypeStruct((n1, n2), jnp.float32),
        grid=(n2 // tn,),
        in_specs=[
            pl.BlockSpec((n1, dim), lambda j: (0, 0)),
            pl.BlockSpec((dim, tn), lambda j: (0, j)),
            pl.BlockSpec((n1, 1), lambda j: (0, 0)),
            pl.BlockSpec((1, tn), lambda j: (0, j)),
        ],
        out_specs=pl.BlockSpec((n1, tn), lambda j: (0, j)),
        compiler_params=pltpu.CompilerParams(
            dimension_semantics=("parallel",),
            vmem_limit_bytes=_VMEM_LIMIT),
    )(x1, x2t, g1c, g2r)


# ---------------------------------------------------------------------------
# Pallas kernel 2: SVGP predictive moments, grid over (L, N-tiles)
#   mean_l = mu_l^T Wt
#   var_l  = base + colsum((Lu_l^T Wt)^2)       base = Kxx - diag(W Kzz W^T)
#   std_l  = sqrt(clamp(var_l, 0.01))
# ---------------------------------------------------------------------------
def _svgp_moments_kernel(wt_ref, base_ref, mu_ref, lut_ref, mean_ref, std_ref):
    wt = wt_ref[...]                                              # (Mz, TN)
    mu_col = mu_ref[0]                                            # (Mz, 1)
    lut = lut_ref[0]                                              # (Mz, Mz) = Lu_l^T
    # mean on the VPU/XLU (M=1 MXU pass would be wasted)
    mean = jnp.sum(mu_col * wt, axis=0, keepdims=True)            # (1, TN)
    a = jnp.dot(lut, wt, preferred_element_type=jnp.float32)      # (Mz, TN)
    quad = jnp.sum(a * a, axis=0, keepdims=True)                  # (1, TN)
    var = base_ref[...] + quad
    mean_ref[0] = mean
    std_ref[0] = jnp.sqrt(jnp.maximum(var, 0.01))


def svgp_moments(Wt, base_var, mu, LuT):
    Lf, Mz = mu.shape
    N = Wt.shape[1]
    tn = _choose_tile(N)
    mu3 = mu[:, :, None]                        # (Lf, Mz, 1) column layout
    base2 = base_var.reshape(1, N)
    mean3, std3 = pl.pallas_call(
        _svgp_moments_kernel,
        out_shape=(jax.ShapeDtypeStruct((Lf, 1, N), jnp.float32),
                   jax.ShapeDtypeStruct((Lf, 1, N), jnp.float32)),
        grid=(Lf, N // tn),
        in_specs=[
            pl.BlockSpec((Mz, tn), lambda l, j: (0, j)),
            pl.BlockSpec((1, tn), lambda l, j: (0, j)),
            pl.BlockSpec((1, Mz, 1), lambda l, j: (l, 0, 0)),
            pl.BlockSpec((1, Mz, Mz), lambda l, j: (l, 0, 0)),
        ],
        out_specs=(pl.BlockSpec((1, 1, tn), lambda l, j: (l, 0, j)),
                   pl.BlockSpec((1, 1, tn), lambda l, j: (l, 0, j))),
        compiler_params=pltpu.CompilerParams(
            dimension_semantics=("parallel", "parallel"),
            vmem_limit_bytes=_VMEM_LIMIT),
    )(Wt, base2, mu3, LuT)
    return mean3.reshape(Lf, N), std3.reshape(Lf, N)


# ---------------------------------------------------------------------------
# Pallas kernel 3: reparameterised sample + exp + NSF mixing
#   grid over (E, N-tiles);  F = exp(mean + std*eps);  rate = |V| * (|W_p| @ F)
# ---------------------------------------------------------------------------
def _nsf_rate_kernel(mean_ref, std_ref, eps_ref, wabs_ref, vabs_ref, rate_ref):
    f = jnp.exp(mean_ref[...] + std_ref[...] * eps_ref[0])        # (Lf, TN)
    w = wabs_ref[...]                                             # (D, Lf)
    d_out, lf = w.shape
    if lf <= 16 and d_out <= 32:
        # tiny contraction (K=Lf, M=D): unrolled VPU broadcast-FMAs beat an
        # MXU pass at <1% utilisation
        acc = w[:, 0:1] * f[0:1, :]
        for l in range(1, lf):
            acc = acc + w[:, l:l + 1] * f[l:l + 1, :]
    else:
        acc = jnp.dot(w, f, preferred_element_type=jnp.float32)   # (D, TN)
    rate_ref[0] = vabs_ref[...] * acc


def nsf_rate(mean, std, eps, W_abs, V_abs_row):
    E, Lf, N = eps.shape
    D = W_abs.shape[0]
    tn = _choose_tile(N)
    return pl.pallas_call(
        _nsf_rate_kernel,
        out_shape=jax.ShapeDtypeStruct((E, D, N), jnp.float32),
        grid=(E, N // tn),
        in_specs=[
            pl.BlockSpec((Lf, tn), lambda e, j: (0, j)),
            pl.BlockSpec((Lf, tn), lambda e, j: (0, j)),
            pl.BlockSpec((1, Lf, tn), lambda e, j: (e, 0, j)),
            pl.BlockSpec((D, Lf), lambda e, j: (0, 0)),
            pl.BlockSpec((1, tn), lambda e, j: (0, j)),
        ],
        out_specs=pl.BlockSpec((1, D, tn), lambda e, j: (e, 0, j)),
        compiler_params=pltpu.CompilerParams(
            dimension_semantics=("parallel", "parallel"),
            vmem_limit_bytes=_VMEM_LIMIT),
    )(mean, std, eps, W_abs, V_abs_row)


# ---------------------------------------------------------------------------
# Plain-JAX glue (parameter transforms, cholesky, solve, orchestration)
# ---------------------------------------------------------------------------
def lower_cholesky_transform(x):
    # torch transform_to(constraints.lower_cholesky):
    # strict lower triangle + exp() of the diagonal on the diagonal
    Mz = x.shape[-1]
    diag = jnp.diagonal(x, axis1=-2, axis2=-1)
    eye = jnp.eye(Mz, dtype=x.dtype)
    return jnp.tril(x, -1) + jnp.exp(diag)[..., :, None] * eye


def mggp_nsf_forward(params, X, groupsX, eps, jitter=JITTER):
    Z, groupsZ = params["Z"], params["groupsZ"]
    Lu_p, mu = params["Lu"], params["mu"]
    Wp, V = params["W"], params["V"]

    N = X.shape[0]
    Mz = Z.shape[0]

    # Pad the data/cell axis once to a multiple of 128 so every Pallas output
    # tile is a lane-dense unmasked store regardless of N.  All per-column
    # math is independent along N, so padded columns are simply sliced away.
    N_pad = ((N + _LANE - 1) // _LANE) * _LANE
    Xp = _pad_axis(X, N_pad, axis=0)
    gXp = _pad_axis(groupsX.astype(jnp.int32), N_pad, axis=0)
    epsp = _pad_axis(eps, N_pad, axis=2)
    Vp = _pad_axis(V, N_pad, axis=0)

    # kernel matrices (Pallas, tiled over the data axis)
    Kzx = mggp_kernel_matrix(Z, Xp, groupsZ, gXp)             # (Mz, N_pad)
    Kzz = mggp_kernel_matrix(Z, Z, groupsZ, groupsZ)          # (Mz, Mz)

    # TODO(synk): cholesky + cholesky_solve have no clean Pallas equivalent;
    # kept in jnp / jax.scipy.
    Lchol = jnp.linalg.cholesky(Kzz + jitter * jnp.eye(Mz, dtype=jnp.float32))
    Wt = jax.scipy.linalg.cho_solve((Lchol, True), Kzx)       # (Mz, N_pad) == W^T

    # l-invariant variance term hoisted out of the per-latent grid:
    #   var_l = Kxx_diag - diag(W Kzz W^T) + colsum((Lu_l^T W^T)^2)
    # Kxx diag = kernel variance (same point, same group).
    base_var = KERNEL_VARIANCE - jnp.sum((Kzz @ Wt) * Wt, axis=0)   # (N_pad,)

    Lu = lower_cholesky_transform(Lu_p)                       # (L, Mz, Mz)
    LuT = jnp.swapaxes(Lu, -1, -2)                            # (L, Mz, Mz)

    # predictive moments of qF (Pallas, grid over (L, N-tiles))
    qf_mean_p, qf_std_p = svgp_moments(Wt, base_var, mu, LuT)  # (L, N_pad)

    # rsample + exp + NSF mixing (Pallas, grid over (E, N-tiles))
    W_abs = jnp.abs(Wp)                                       # (D, L)
    V_abs = jnp.abs(Vp).reshape(1, N_pad)
    rate_p = nsf_rate(qf_mean_p, qf_std_p, epsp, W_abs, V_abs)  # (E, D, N_pad)

    qf_mean = qf_mean_p[:, :N]
    qf_std = qf_std_p[:, :N]
    rate = rate_p[:, :, :N]

    qF = (qf_mean, qf_std)                     # Normal(mean, std) params
    qU = (mu, Lu)                              # MVN(mu, scale_tril=Lu) params
    pU = (jnp.zeros_like(mu), Lchol)           # MVN(0, scale_tril=L) params
    return rate, qF, qU, pU


# ---------------------------------------------------------------------------
# Pure-JAX reference (mirrors the PyTorch module math exactly)
# ---------------------------------------------------------------------------
def _reference_forward(params, X, groupsX, eps, jitter=JITTER):
    Z, gZ = params["Z"], params["groupsZ"]

    def kmat(a, b, ga, gb):
        sq = jnp.sum((a[:, None, :] - b[None, :, :]) ** 2, axis=-1)
        scale = jnp.where(ga[:, None] == gb[None, :], 1.0, KERNEL_CROSS_GROUP)
        return (KERNEL_VARIANCE * scale *
                jnp.exp(-sq / (2.0 * KERNEL_LENGTHSCALE ** 2)))

    Kzx = kmat(Z, X, gZ, groupsX)
    Kzz = kmat(Z, Z, gZ, gZ)
    Kxx = jnp.full((X.shape[0],), KERNEL_VARIANCE, dtype=jnp.float32)
    L = jnp.linalg.cholesky(Kzz + jitter * jnp.eye(Z.shape[0], dtype=jnp.float32))
    W = jax.scipy.linalg.cho_solve((L, True), Kzx).T          # (N, Mz)
    Lu = lower_cholesky_transform(params["Lu"])               # (L, Mz, Mz)
    S = Lu @ jnp.swapaxes(Lu, -1, -2)
    mean = jnp.einsum("nm,lm->ln", W, params["mu"])
    diff = S - Kzz[None]
    cov_diag = Kxx[None, :] + jnp.einsum("nm,lmk,nk->ln", W, diff, W)
    std = jnp.sqrt(jnp.maximum(cov_diag, 0.01))
    F = jnp.exp(mean[None] + std[None] * eps)
    rate = (jnp.abs(params["V"])[None, None, :] *
            jnp.einsum("dl,eln->edn", jnp.abs(params["W"]), F))
    return rate, mean, std


if __name__ == "__main__":
    key = jax.random.PRNGKey(0)

    # small shapes consistent with the module: dim=2 spatial coords,
    # M inducing points per group, n_groups groups, D genes, L factors, E MC samples
    M, n_groups, dim = 8, 2, 2
    Mz = n_groups * M            # 16 inducing points total
    N, D, Lf, E = 24, 5, 4, 3

    k_z, k_lu, k_w, k_x, k_eps = jax.random.split(key, 5)
    params = {
        "Z": jax.random.normal(k_z, (Mz, dim), dtype=jnp.float32),
        "groupsZ": jnp.concatenate(
            [jnp.full((M,), i, dtype=jnp.int32) for i in range(n_groups)]),
        "Lu": 0.05 * jax.random.uniform(k_lu, (Lf, Mz, Mz), dtype=jnp.float32),
        "mu": jnp.zeros((Lf, Mz), dtype=jnp.float32),
        "W": jax.random.uniform(k_w, (D, Lf), dtype=jnp.float32),
        "V": jnp.ones((N,), dtype=jnp.float32),
    }

    X = jax.random.normal(k_x, (N, dim), dtype=jnp.float32)
    groupsX = jnp.concatenate([jnp.zeros((N // 2,), jnp.int32),
                               jnp.ones((N - N // 2,), jnp.int32)])
    # standard-normal noise for qF.rsample((E,))
    eps = jax.random.normal(k_eps, (E, Lf, N), dtype=jnp.float32)

    rate, (qf_mean, qf_std), (qu_mu, qu_L), (pu_mu, pu_L) = mggp_nsf_forward(
        params, X, groupsX, eps)
    jax.block_until_ready(rate)

    assert rate.shape == (E, D, N)
    assert qf_mean.shape == (Lf, N) and qf_std.shape == (Lf, N)
    assert bool(jnp.all(jnp.isfinite(rate)))
    assert bool(jnp.all(rate >= 0.0))

    # correctness against a pure-JAX reference of the original module math
    rate_r, mean_r, std_r = _reference_forward(params, X, groupsX, eps)
    assert bool(jnp.allclose(qf_mean, mean_r, rtol=1e-3, atol=1e-3))
    assert bool(jnp.allclose(qf_std, std_r, rtol=1e-3, atol=1e-3))
    assert bool(jnp.allclose(rate, rate_r, rtol=1e-3, atol=1e-3))
    print("KERNEL_OK")
</pallas_src>

<mosaic_0001>
module attributes {stable_mosaic.version = 11 : i64} {
  func.func @_mggp_rbf_kernel(%arg0: i32, %arg1: memref<16x2xf32, #tpu.memory_space<vmem>>, %arg2: memref<2x128xf32, #tpu.memory_space<vmem>>, %arg3: memref<16x1xi32, #tpu.memory_space<vmem>>, %arg4: memref<1x128xi32, #tpu.memory_space<vmem>>, %arg5: memref<16x128xf32, #tpu.memory_space<vmem>>) attributes {dimension_semantics = [#tpu.dimension_semantics<parallel>], iteration_bounds = array<i64: 1>, scalar_prefetch = 0 : i64, scratch_operands = 0 : i64, tpu.core_type = #tpu.core_type<tc>, window_params = [{pipeline_mode = #tpu.pipeline_mode<synchronous>, transform_indices = @transform_0, window_bounds = array<i64: 16, 2>}, {transform_indices = @transform_1, window_bounds = array<i64: 2, 128>}, {pipeline_mode = #tpu.pipeline_mode<synchronous>, transform_indices = @transform_2, window_bounds = array<i64: 16, 1>}, {transform_indices = @transform_3, window_bounds = array<i64: 1, 128>}, {transform_indices = @transform_4, window_bounds = array<i64: 16, 128>}]} {
    %c0 = arith.constant 0 : index
    %c0_0 = arith.constant 0 : index
    %0 = vector.load %arg1[%c0, %c0_0] : memref<16x2xf32, #tpu.memory_space<vmem>>, vector<16x2xf32>
    %c0_1 = arith.constant 0 : index
    %c0_2 = arith.constant 0 : index
    %1 = vector.load %arg2[%c0_1, %c0_2] : memref<2x128xf32, #tpu.memory_space<vmem>>, vector<2x128xf32>
    %2 = vector.extract_strided_slice %0 {offsets = [0, 0], sizes = [16, 1], strides = [1, 1]} : vector<16x2xf32> to vector<16x1xf32>
    %3 = vector.extract_strided_slice %1 {offsets = [0, 0], sizes = [1, 128], strides = [1, 1]} : vector<2x128xf32> to vector<1x128xf32>
    %4 = vector.broadcast %2 : vector<16x1xf32> to vector<16x128xf32>
    %5 = vector.broadcast %3 : vector<1x128xf32> to vector<16x128xf32>
    %6 = arith.subf %4, %5 : vector<16x128xf32>
    %7 = arith.mulf %6, %6 : vector<16x128xf32>
    %8 = vector.extract_strided_slice %0 {offsets = [0, 1], sizes = [16, 1], strides = [1, 1]} : vector<16x2xf32> to vector<16x1xf32>
    %9 = vector.extract_strided_slice %1 {offsets = [1, 0], sizes = [1, 128], strides = [1, 1]} : vector<2x128xf32> to vector<1x128xf32>
    %10 = vector.broadcast %8 : vector<16x1xf32> to vector<16x128xf32>
    %11 = vector.broadcast %9 : vector<1x128xf32> to vector<16x128xf32>
    %12 = arith.subf %10, %11 : vector<16x128xf32>
    %13 = arith.mulf %12, %12 : vector<16x128xf32>
    %14 = arith.addf %7, %13 : vector<16x128xf32>
    %c0_3 = arith.constant 0 : index
    %c0_4 = arith.constant 0 : index
    %15 = vector.load %arg3[%c0_3, %c0_4] : memref<16x1xi32, #tpu.memory_space<vmem>>, vector<16x1xi32>
    %c0_5 = arith.constant 0 : index
    %c0_6 = arith.constant 0 : index
    %16 = vector.load %arg4[%c0_5, %c0_6] : memref<1x128xi32, #tpu.memory_space<vmem>>, vector<1x128xi32>
    %17 = vector.broadcast %15 : vector<16x1xi32> to vector<16x128xi32>
    %18 = vector.broadcast %16 : vector<1x128xi32> to vector<16x128xi32>
    %19 = arith.cmpi eq, %17, %18 : vector<16x128xi32>
    %cst = arith.constant 1.000000e+00 : f32
    %cst_7 = arith.constant 5.000000e-01 : f32
    %20 = vector.broadcast %cst : f32 to vector<16x128xf32>
    %21 = vector.broadcast %cst_7 : f32 to vector<16x128xf32>
    %22 = arith.select %19, %20, %21 : vector<16x128xi1>, vector<16x128xf32>
    %cst_8 = arith.constant 1.000000e+00 : f32
    %23 = vector.broadcast %cst_8 : f32 to vector<16x128xf32>
    %24 = arith.mulf %23, %22 : vector<16x128xf32>
    %cst_9 = arith.constant -5.000000e-01 : f32
    %25 = vector.broadcast %cst_9 : f32 to vector<16x128xf32>
    %26 = arith.mulf %14, %25 : vector<16x128xf32>
    %27 = math.exp %26 : vector<16x128xf32>
    %28 = arith.mulf %24, %27 : vector<16x128xf32>
    %c0_10 = arith.constant 0 : index
    %c0_11 = arith.constant 0 : index
    %29 = vector.load %arg5[%c0_10, %c0_11] : memref<16x128xf32, #tpu.memory_space<vmem>>, vector<16x128xf32>
    tpu.vector_store %arg5[%c0_10, %c0_11], %28 {strides = array<i32>} : memref<16x128xf32, #tpu.memory_space<vmem>>, vector<16x128xf32>,
    return
  }
  func.func @transform_0(%arg0: i32) -> (i32, i32) {
    %c0_i32 = arith.constant 0 : i32
    %c0_i32_0 = arith.constant 0 : i32
    %c0_i32_1 = arith.constant 0 : i32
    return %c0_i32, %c0_i32_0 : i32, i32
  }
  func.func @transform_1(%arg0: i32) -> (i32, i32) {
    %c0_i32 = arith.constant 0 : i32
    %c0_i32_0 = arith.constant 0 : i32
    return %c0_i32, %arg0 : i32, i32
  }
  func.func @transform_2(%arg0: i32) -> (i32, i32) {
    %c0_i32 = arith.constant 0 : i32
    %c0_i32_0 = arith.constant 0 : i32
    %c0_i32_1 = arith.constant 0 : i32
    return %c0_i32, %c0_i32_0 : i32, i32
  }
  func.func @transform_3(%arg0: i32) -> (i32, i32) {
    %c0_i32 = arith.constant 0 : i32
    %c0_i32_0 = arith.constant 0 : i32
    return %c0_i32, %arg0 : i32, i32
  }
  func.func @transform_4(%arg0: i32) -> (i32, i32) {
    %c0_i32 = arith.constant 0 : i32
    %c0_i32_0 = arith.constant 0 : i32
    return %c0_i32, %arg0 : i32, i32
  }
}

</mosaic_0001>

<llo_original>
// kernel: tpu_custom_call.1
$region0: #{tpu_custom_call.1}
  #allocation0 [shape = 'u32[]', space=smem, size = 0x4, offset = 0x4, fixed_abs, tag = 'smem constant byte address 0x4 - core index']
  #allocation1 [shape = 'u32[144,128]{1,0:T(1,128)}', space=vmem, size = 0x12000, scoped, tag = 'internal scratch']
  %s0 = inlined_call_operand.vmem [shape: f32[16,2], index: 0, kind: input, shape index: {}]
  %s1 = inlined_call_operand.vmem [shape: f32[2,128], index: 1, kind: input, shape index: {}]
  %s2 = inlined_call_operand.vmem [shape: s32[16,1], index: 2, kind: input, shape index: {}]
  %s3 = inlined_call_operand.vmem [shape: s32[1,128], index: 3, kind: input, shape index: {}]
  %s4 = inlined_call_operand.hbm [shape: f32[16,128], index: 4, kind: output, shape index: {}]
  %s5 = sld [smem:[#allocation0]]
  $region26: #{tpu_custom_call.1} parent=0
    _
  %s7 = ssub.s32 1, %s5
  %s8 = scalar_select 0, %s7, %s5
  $region1: #{tpu_custom_call.1} parent=0
    #allocation2 [shape = 'u8[8192]{0}', space=vmem, size = 0x2000, scoped, tag = 'output window, operand 0, single buffered']
    #allocation3 [shape = 's32[1]{0}', space=sflag, size = 0x4, scoped, tag = 'scoped memory for tpu_custom_call.1']
    %9 = vsyncpa [#allocation3], 0
    // Predicated region
    $region2: #{tpu_custom_call.1} parent=1 // pred_check
      _
    $region3: #{tpu_custom_call.1} parent=1 // pred_check_branch
      %11 = sbr.rel (0) target = $region5
    $region4: #{tpu_custom_call.1} parent=1 // pred_region
      _
    $region5: #{tpu_custom_call.1} parent=1 // pred_fallthru
      _
    // Predicated region
    $region6: #{tpu_custom_call.1} parent=1 // pred_check
      _
    $region7: #{tpu_custom_call.1} parent=1 // pred_check_branch
      %13 = sbr.rel (0) target = $region9
    $region8: #{tpu_custom_call.1} parent=1 // pred_region
      _
    $region9: #{tpu_custom_call.1} parent=1 // pred_fallthru
      _
    // Predicated region
    $region10: #{tpu_custom_call.1} parent=1 // pred_check
      _
    $region11: #{tpu_custom_call.1} parent=1 // pred_check_branch
      %15 = sbr.rel (0) target = $region13
    $region12: #{tpu_custom_call.1} parent=1 // pred_region
      _
    $region13: #{tpu_custom_call.1} parent=1 // pred_fallthru
      _
    // Predicated region
    $region14: #{tpu_custom_call.1} parent=1 // pred_check
      _
    $region15: #{tpu_custom_call.1} parent=1 // pred_check_branch
      %17 = sbr.rel (0) target = $region17
    $region16: #{tpu_custom_call.1} parent=1 // pred_region
      _
    $region17: #{tpu_custom_call.1} parent=1 // pred_fallthru
      _
    %v18 = vld [vmem:[%s0] sm:$0xff]
    %v19 = vld [vmem:[%s0 + $0x8] sm:$0xff]
    %v20 = vld [vmem:[%s1] sm:$0x3]
    %22 = vset.pattern.permute.xlu0 0
    %23 = vperm.xlu0 %22, %v18
    %v24 = vpop.permute.xlu0 %23
    %27 = vset.pattern.permute.xlu0 0
    %28 = vperm.xlu0 %27, %v19
    %v29 = vpop.permute.xlu0 %28
    %v31 = vlaneseq
    %v32 = vshrl.u32 %v31, 7
    %v33 = vsub.s32 0, %v32
    %v34 = vrot.slane %v20, %v33
    %v35 = vsub.f32 %v24, %v34
    %v36 = vsub.f32 %v29, %v34
    %v37 = vmul.f32 %v35, %v35
    %v38 = vmul.f32 %v36, %v36
    %39 = vset.pattern.permute.xlu0 1
    %40 = vperm.xlu0 %39, %v18
    %v41 = vpop.permute.xlu0 %40
    %43 = vset.pattern.permute.xlu0 1
    %44 = vperm.xlu0 %43, %v19
    %v45 = vpop.permute.xlu0 %44
    %v47 = vlaneseq
    %v48 = vshrl.u32 %v47, 7
    %v49 = vsub.s32 1, %v48
    %v50 = vrot.slane %v20, %v49
    %v51 = vsub.f32 %v41, %v50
    %v52 = vsub.f32 %v45, %v50
    %v53 = vmul.f32 %v51, %v51
    %v54 = vmul.f32 %v52, %v52
    %v55 = vadd.f32 %v37, %v53
    %v56 = vadd.f32 %v38, %v54
    %v57 = vld [vmem:[%s2] sm:$0xff]
    %v58 = vld [vmem:[%s2 + $0x8] sm:$0xff]
    %v59 = vld [vmem:[%s3] sm:$0x1]
    %60 = vset.pattern.permute.xlu0 0
    %61 = vperm.xlu0 %60, %v57
    %v62 = vpop.permute.xlu0 %61
    %63 = vset.pattern.permute.xlu0 0
    %64 = vperm.xlu0 %63, %v58
    %v65 = vpop.permute.xlu0 %64
    %v66 = vlaneseq
    %v67 = vshrl.u32 %v66, 7
    %v68 = vsub.s32 0, %v67
    %v69 = vrot.slane %v59, %v68
    %vm70 = vcmp.eq.s32.totalorder %v62, %v69
    %vm71 = vcmp.eq.s32.totalorder %v65, %v69
    %v72 = vsel %vm70, 1.0, 0.5
    %v73 = vsel %vm71, 1.0, 0.5
    %v74 = vmul.f32 %v55, -0.5
    %v75 = vmul.f32 %v56, -0.5
    %v76 = vmul.f32 %v74, 1.442695
    %v77 = vpow.pop %v76
    %v78 = vmul.f32 %v75, 1.442695
    %v79 = vpow.pop %v78
    %v80 = vmul.f32 %v72, %v77
    %v81 = vmul.f32 %v73, %v79
    %82 = vst [vmem:[#allocation2] sm:$0xff] %v80
    %83 = vst [vmem:[#allocation2 + $0x8] sm:$0xff] %v81
    // Predicated region
    $region18: #{tpu_custom_call.1} parent=1 // pred_check
      _
    $region19: #{tpu_custom_call.1} parent=1 // pred_check_branch
      %85 = sbr.rel (0) target = $region21
    $region20: #{tpu_custom_call.1} parent=1 // pred_region
      %s87 = ssub.s32 256, 256
      %88 = vsyncadd [#allocation3], %s87
      %s89 = sshll.u32 [#allocation2], 4
      %s90 = int_to_ptr.vmem [resolvable:$true] %s89
      %95 = dma.vmem_to_hbm [thread:$0]  %s90, 256, %s4, [#allocation3], 128, 128, 8
    $region21: #{tpu_custom_call.1} parent=1 // pred_fallthru
      _
    // Predicated region
    $region22: #{tpu_custom_call.1} parent=1 // pred_check
      _
    $region23: #{tpu_custom_call.1} parent=1 // pred_check_branch
      %97 = sbr.rel (0) target = $region25
    $region24: #{tpu_custom_call.1} parent=1 // pred_region
      %98 = dma.done [#allocation3], 256
    $region25: #{tpu_custom_call.1} parent=1 // pred_fallthru
      _
    %99 = vsyncpa [#allocation3], 1

</llo_original>
